<compile_context>
chip_gen: v5e
topology: v5e:2x2
jax: 0.10.0
libtpu: 0.0.40
codegen_flags: <defaults>
</compile_context>

<pallas_src>
import jax
import jax.numpy as jnp
from jax.experimental import pallas as pl
from jax.experimental.pallas import tpu as pltpu


K_IN = 28 * 28          # 784 (784 % 8 == 0 -> legal as a full-extent block dim)
HIDDEN = 128
N_OUT = 10
N_PAD = 128             # lane-dense padded output width (unmasked full-width stores)


def _round_up(x, m):
    return ((x + m - 1) // m) * m


def mlp_kernel(x_ref, w1_ref, b1_ref, w2_ref, b2_ref, o_ref):
    # Cast the f32 x tile to bf16 in-register (VPU) just before the MXU dot:
    # halves effective MXU input width without any extra HBM traffic.
    x_bf = x_ref[...].astype(jnp.bfloat16)
    # Hidden layer: (tile_b, 784)bf16 @ (784, 128)bf16 -> f32 acc, +bias, ReLU (VPU).
    h = jnp.dot(x_bf, w1_ref[...], preferred_element_type=jnp.float32)
    h = jnp.maximum(h + b1_ref[...], 0.0)
    # Output layer: (tile_b, 128)bf16 @ (128, 128)bf16 -> f32 acc, +bias.
    out = jnp.dot(h.astype(jnp.bfloat16), w2_ref[...],
                  preferred_element_type=jnp.float32)
    o_ref[...] = (out + b2_ref[...]).astype(o_ref.dtype)   # bf16 writeback


def prepare_params(w1, b1, w2, b2):
    """One-time parameter prep (hoisted out of the forward path).

    w1: (784, 128), b1: (128,), w2: (128, 10), b2: (10,)  [pre-transposed vs nn.Linear]
    Returns VMEM-friendly versions: bf16 weights, f32 (1, .) biases, w2/b2 padded
    to 128 lane-dense output columns.
    """
    w1_p = w1.astype(jnp.bfloat16)                                    # (784, 128)
    b1_2d = b1.reshape(1, HIDDEN).astype(jnp.float32)                 # (1, 128)
    w2_p = jnp.zeros((HIDDEN, N_PAD), jnp.bfloat16)
    w2_p = w2_p.at[:, :N_OUT].set(w2.astype(jnp.bfloat16))            # (128, 128)
    b2_p = jnp.zeros((1, N_PAD), jnp.float32)
    b2_p = b2_p.at[:, :N_OUT].set(b2.astype(jnp.float32))             # (1, 128)
    return w1_p, b1_2d, w2_p, b2_p


def simple_mlp_forward(x, params, *, tile_b=1024):
    """x: (B, 1, 28, 28) or (B, 784); params from prepare_params(). Returns (B, 10) f32."""
    w1_p, b1_2d, w2_p, b2_p = params

    x2d = x.reshape(-1, K_IN)                       # mirrors x.view(-1, 28*28)
    if x2d.dtype not in (jnp.float32, jnp.bfloat16):
        x2d = x2d.astype(jnp.float32)
    B = x2d.shape[0]

    # Clamp the batch tile to the real batch and aim for >= 2 grid steps for
    # modest B (keeps both v7x TensorCores busy via the "parallel" axis) while
    # staying MXU/sublane aligned.  Default 1024 keeps f32-x double buffering
    # (~6.4 MiB) well under the 16 MiB v5e scoped-VMEM default.
    tile_b = min(tile_b, max(128, _round_up(pl.cdiv(B, 2), 128)))
    n_tiles = pl.cdiv(B, tile_b)
    B_pad = n_tiles * tile_b
    if B_pad != B:
        x2d = jnp.pad(x2d, ((0, B_pad - B), (0, 0)))   # batch-only pad, no cast

    itemsize = x2d.dtype.itemsize
    cost = pl.CostEstimate(
        flops=2 * B_pad * (K_IN * HIDDEN + HIDDEN * N_PAD),
        transcendentals=0,
        bytes_accessed=(B_pad * K_IN * itemsize          # x streamed
                        + B_pad * N_PAD * 2              # bf16 output writeback
                        + K_IN * HIDDEN * 2              # w1 (bf16)
                        + HIDDEN * N_PAD * 2             # w2 (bf16)
                        + (HIDDEN + N_PAD) * 4),         # biases (f32)
    )

    out = pl.pallas_call(
        mlp_kernel,
        out_shape=jax.ShapeDtypeStruct((B_pad, N_PAD), jnp.bfloat16),
        grid_spec=pltpu.PrefetchScalarGridSpec(
            num_scalar_prefetch=0,
            grid=(n_tiles,),
            in_specs=[
                pl.BlockSpec((tile_b, K_IN), lambda i: (i, 0)),    # x tile (streamed)
                pl.BlockSpec((K_IN, HIDDEN), lambda i: (0, 0)),    # w1 (VMEM-resident)
                pl.BlockSpec((1, HIDDEN), lambda i: (0, 0)),       # b1
                pl.BlockSpec((HIDDEN, N_PAD), lambda i: (0, 0)),   # w2 (VMEM-resident)
                pl.BlockSpec((1, N_PAD), lambda i: (0, 0)),        # b2
            ],
            out_specs=pl.BlockSpec((tile_b, N_PAD), lambda i: (i, 0)),
        ),
        compiler_params=pltpu.CompilerParams(
            dimension_semantics=("parallel",),
        ),
        cost_estimate=cost,
    )(x2d, w1_p, b1_2d, w2_p, b2_p)

    # Slice off batch/column padding; cast back to f32 to match nn.Linear output dtype.
    return out[:B, :N_OUT].astype(jnp.float32)


def init_params(key):
    """Deterministic init matching nn.Linear shapes (returned pre-transposed)."""
    k1, k2, k3, k4 = jax.random.split(key, 4)
    # nn.Linear(784, 128): Uniform(-1/sqrt(in), 1/sqrt(in)).
    lim1 = 1.0 / (K_IN) ** 0.5
    w1_t = jax.random.uniform(k1, (K_IN, HIDDEN), jnp.float32, -lim1, lim1)   # (in, out)
    b1 = jax.random.uniform(k2, (HIDDEN,), jnp.float32, -lim1, lim1)
    lim2 = 1.0 / HIDDEN ** 0.5
    w2_t = jax.random.uniform(k3, (HIDDEN, N_OUT), jnp.float32, -lim2, lim2)
    b2 = jax.random.uniform(k4, (N_OUT,), jnp.float32, -lim2, lim2)
    return w1_t, b1, w2_t, b2


if __name__ == "__main__":
    key = jax.random.PRNGKey(0)
    kx, kp = jax.random.split(key)
    # Small batch of MNIST-shaped inputs (B, 1, 28, 28) — forward flattens to (B, 784).
    x = jax.random.normal(kx, (8, 1, 28, 28), jnp.float32)
    w1, b1, w2, b2 = init_params(kp)
    params = prepare_params(w1, b1, w2, b2)          # one-time prep, outside forward

    out = simple_mlp_forward(x, params)
    out = jax.block_until_ready(out)
    assert out.shape == (8, 10)
    assert out.dtype == jnp.float32

    # Reference with matching bf16 matmul inputs / f32 accumulation (then bf16 store).
    x2d = x.reshape(-1, K_IN)
    hb = jnp.dot(x2d.astype(jnp.bfloat16), w1.astype(jnp.bfloat16),
                 preferred_element_type=jnp.float32) + b1
    hb = jnp.maximum(hb, 0.0)
    ref_bf16 = jnp.dot(hb.astype(jnp.bfloat16), w2.astype(jnp.bfloat16),
                       preferred_element_type=jnp.float32) + b2
    assert jnp.allclose(out, ref_bf16, atol=2e-2, rtol=2e-2)

    # Loose sanity check against the pure-f32 forward (bf16 quantization error bound).
    ref_f32 = jnp.maximum(x2d @ w1 + b1, 0.0) @ w2 + b2
    assert jnp.allclose(out, ref_f32, atol=5e-2, rtol=5e-2)

    print("KERNEL_OK")
</pallas_src>

<mosaic_0001>
module attributes {stable_mosaic.version = 11 : i64} {
  func.func @mlp_kernel(%arg0: i32, %arg1: memref<128x784xf32, #tpu.memory_space<vmem>>, %arg2: memref<784x128xbf16, #tpu.memory_space<vmem>>, %arg3: memref<1x128xf32, #tpu.memory_space<vmem>>, %arg4: memref<128x128xbf16, #tpu.memory_space<vmem>>, %arg5: memref<1x128xf32, #tpu.memory_space<vmem>>, %arg6: memref<128x128xbf16, #tpu.memory_space<vmem>>) attributes {dimension_semantics = [#tpu.dimension_semantics<parallel>], iteration_bounds = array<i64: 1>, scalar_prefetch = 0 : i64, scratch_operands = 0 : i64, tpu.core_type = #tpu.core_type<tc>, window_params = [{transform_indices = @transform_0, window_bounds = array<i64: 128, 784>}, {pipeline_mode = #tpu.pipeline_mode<synchronous>, transform_indices = @transform_1, window_bounds = array<i64: 784, 128>}, {pipeline_mode = #tpu.pipeline_mode<synchronous>, transform_indices = @transform_2, window_bounds = array<i64: 1, 128>}, {pipeline_mode = #tpu.pipeline_mode<synchronous>, transform_indices = @transform_3, window_bounds = array<i64: 128, 128>}, {pipeline_mode = #tpu.pipeline_mode<synchronous>, transform_indices = @transform_4, window_bounds = array<i64: 1, 128>}, {transform_indices = @transform_5, window_bounds = array<i64: 128, 128>}]} {
    %c0 = arith.constant 0 : index
    %c0_0 = arith.constant 0 : index
    %0 = vector.load %arg1[%c0, %c0_0] : memref<128x784xf32, #tpu.memory_space<vmem>>, vector<128x784xf32>
    %1 = arith.truncf %0 : vector<128x784xf32> to vector<128x784xbf16>
    %c0_1 = arith.constant 0 : index
    %c0_2 = arith.constant 0 : index
    %2 = vector.load %arg2[%c0_1, %c0_2] : memref<784x128xbf16, #tpu.memory_space<vmem>>, vector<784x128xbf16>
    %cst = arith.constant dense<0.000000e+00> : vector<128x128xf32>
    %3 = tpu.matmul %1, %2, %cst {dimension_numbers = #tpu.dot_dimension_numbers<[1], [0], [0], [1], [0, 0, 1, 1], [], []>} : vector<128x784xbf16>, vector<784x128xbf16>, vector<128x128xf32> -> vector<128x128xf32>
    %c0_3 = arith.constant 0 : index
    %c0_4 = arith.constant 0 : index
    %4 = vector.load %arg3[%c0_3, %c0_4] : memref<1x128xf32, #tpu.memory_space<vmem>>, vector<1x128xf32>
    %5 = vector.broadcast %4 : vector<1x128xf32> to vector<128x128xf32>
    %6 = arith.addf %3, %5 : vector<128x128xf32>
    %cst_5 = arith.constant 0.000000e+00 : f32
    %7 = vector.broadcast %cst_5 : f32 to vector<128x128xf32>
    %8 = arith.maximumf %6, %7 : vector<128x128xf32>
    %9 = arith.truncf %8 : vector<128x128xf32> to vector<128x128xbf16>
    %c0_6 = arith.constant 0 : index
    %c0_7 = arith.constant 0 : index
    %10 = vector.load %arg4[%c0_6, %c0_7] : memref<128x128xbf16, #tpu.memory_space<vmem>>, vector<128x128xbf16>
    %cst_8 = arith.constant dense<0.000000e+00> : vector<128x128xf32>
    %11 = tpu.matmul %9, %10, %cst_8 {dimension_numbers = #tpu.dot_dimension_numbers<[1], [0], [0], [1], [0, 0, 1, 1], [], []>} : vector<128x128xbf16>, vector<128x128xbf16>, vector<128x128xf32> -> vector<128x128xf32>
    %c0_9 = arith.constant 0 : index
    %c0_10 = arith.constant 0 : index
    %12 = vector.load %arg5[%c0_9, %c0_10] : memref<1x128xf32, #tpu.memory_space<vmem>>, vector<1x128xf32>
    %13 = vector.broadcast %12 : vector<1x128xf32> to vector<128x128xf32>
    %14 = arith.addf %11, %13 : vector<128x128xf32>
    %15 = arith.truncf %14 : vector<128x128xf32> to vector<128x128xbf16>
    %c0_11 = arith.constant 0 : index
    %c0_12 = arith.constant 0 : index
    %16 = vector.load %arg6[%c0_11, %c0_12] : memref<128x128xbf16, #tpu.memory_space<vmem>>, vector<128x128xbf16>
    tpu.vector_store %arg6[%c0_11, %c0_12], %15 {strides = array<i32>} : memref<128x128xbf16, #tpu.memory_space<vmem>>, vector<128x128xbf16>,
    return
  }
  func.func @transform_0(%arg0: i32) -> (i32, i32) {
    %c0_i32 = arith.constant 0 : i32
    %c0_i32_0 = arith.constant 0 : i32
    return %arg0, %c0_i32 : i32, i32
  }
  func.func @transform_1(%arg0: i32) -> (i32, i32) {
    %c0_i32 = arith.constant 0 : i32
    %c0_i32_0 = arith.constant 0 : i32
    %c0_i32_1 = arith.constant 0 : i32
    return %c0_i32, %c0_i32_0 : i32, i32
  }
  func.func @transform_2(%arg0: i32) -> (i32, i32) {
    %c0_i32 = arith.constant 0 : i32
    %c0_i32_0 = arith.constant 0 : i32
    %c0_i32_1 = arith.constant 0 : i32
    return %c0_i32, %c0_i32_0 : i32, i32
  }
  func.func @transform_3(%arg0: i32) -> (i32, i32) {
    %c0_i32 = arith.constant 0 : i32
    %c0_i32_0 = arith.constant 0 : i32
    %c0_i32_1 = arith.constant 0 : i32
    return %c0_i32, %c0_i32_0 : i32, i32
  }
  func.func @transform_4(%arg0: i32) -> (i32, i32) {
    %c0_i32 = arith.constant 0 : i32
    %c0_i32_0 = arith.constant 0 : i32
    %c0_i32_1 = arith.constant 0 : i32
    return %c0_i32, %c0_i32_0 : i32, i32
  }
  func.func @transform_5(%arg0: i32) -> (i32, i32) {
    %c0_i32 = arith.constant 0 : i32
    %c0_i32_0 = arith.constant 0 : i32
    return %arg0, %c0_i32 : i32, i32
  }
}

</mosaic_0001>

<llo_original>
// kernel: tpu_custom_call.1
$region0: #{tpu_custom_call.1}
  #allocation0 [shape = 'u32[]', space=smem, size = 0x4, offset = 0x4, fixed_abs, tag = 'smem constant byte address 0x4 - core index']
  #allocation1 [shape = 'u32[72,128]{1,0:T(1,128)}', space=vmem, size = 0x9000, scoped, tag = 'internal scratch']
  %s0 = inlined_call_operand.vmem [shape: f32[128,784], index: 0, kind: input, shape index: {}]
  %s1 = inlined_call_operand.vmem [shape: bf16[784,128], index: 1, kind: input, shape index: {}]
  %s2 = inlined_call_operand.vmem [shape: f32[1,128], index: 2, kind: input, shape index: {}]
  %s3 = inlined_call_operand.vmem [shape: bf16[128,128], index: 3, kind: input, shape index: {}]
  %s4 = inlined_call_operand.vmem [shape: f32[1,128], index: 4, kind: input, shape index: {}]
  %s5 = inlined_call_operand.hbm [shape: bf16[128,128], index: 5, kind: output, shape index: {}]
  %s6 = sld [smem:[#allocation0]]
  $region30: #{tpu_custom_call.1} parent=0
    _
  %s8 = ssub.s32 1, %s6
  %s9 = scalar_select 0, %s8, %s6
  $region1: #{tpu_custom_call.1} parent=0
    #allocation2 [shape = 'u8[32768]{0}', space=vmem, size = 0x8000, scoped, tag = 'output window, operand 0, single buffered']
    #allocation3 [shape = 's32[1]{0}', space=sflag, size = 0x4, scoped, tag = 'scoped memory for tpu_custom_call.1']
    %10 = vsyncpa [#allocation3], 0
    // Predicated region
    $region2: #{tpu_custom_call.1} parent=1 // pred_check
      _
    $region3: #{tpu_custom_call.1} parent=1 // pred_check_branch
      %12 = sbr.rel (0) target = $region5
    $region4: #{tpu_custom_call.1} parent=1 // pred_region
      _
    $region5: #{tpu_custom_call.1} parent=1 // pred_fallthru
      _
    // Predicated region
    $region6: #{tpu_custom_call.1} parent=1 // pred_check
      _
    $region7: #{tpu_custom_call.1} parent=1 // pred_check_branch
      %14 = sbr.rel (0) target = $region9
    $region8: #{tpu_custom_call.1} parent=1 // pred_region
      _
    $region9: #{tpu_custom_call.1} parent=1 // pred_fallthru
      _
    // Predicated region
    $region10: #{tpu_custom_call.1} parent=1 // pred_check
      _
    $region11: #{tpu_custom_call.1} parent=1 // pred_check_branch
      %16 = sbr.rel (0) target = $region13
    $region12: #{tpu_custom_call.1} parent=1 // pred_region
      _
    $region13: #{tpu_custom_call.1} parent=1 // pred_fallthru
      _
    // Predicated region
    $region14: #{tpu_custom_call.1} parent=1 // pred_check
      _
    $region15: #{tpu_custom_call.1} parent=1 // pred_check_branch
      %18 = sbr.rel (0) target = $region17
    $region16: #{tpu_custom_call.1} parent=1 // pred_region
      _
    $region17: #{tpu_custom_call.1} parent=1 // pred_fallthru
      _
    // Predicated region
    $region18: #{tpu_custom_call.1} parent=1 // pred_check
      _
    $region19: #{tpu_custom_call.1} parent=1 // pred_check_branch
      %20 = sbr.rel (0) target = $region21
    $region20: #{tpu_custom_call.1} parent=1 // pred_region
      _
    $region21: #{tpu_custom_call.1} parent=1 // pred_fallthru
      _
    %v22 = vld [vmem:[%s0] sm:$0xff]
    %v23 = vld [vmem:[%s0 + $0x8] sm:$0xff]
    %v24 = vld [vmem:[%s0 + $0x10] sm:$0xff]
    %v25 = vld [vmem:[%s0 + $0x18] sm:$0xff]
    %v26 = vld [vmem:[%s0 + $0x20] sm:$0xff]
    %v27 = vld [vmem:[%s0 + $0x28] sm:$0xff]
    %v28 = vld [vmem:[%s0 + $0x30] sm:$0xff]
    %v29 = vld [vmem:[%s0 + $0x38] sm:$0xff]
    %v30 = vld [vmem:[%s0 + $0x40] sm:$0xff]
    %v31 = vld [vmem:[%s0 + $0x48] sm:$0xff]
    %v32 = vld [vmem:[%s0 + $0x50] sm:$0xff]
    %v33 = vld [vmem:[%s0 + $0x58] sm:$0xff]
    %v34 = vld [vmem:[%s0 + $0x60] sm:$0xff]
    %v35 = vld [vmem:[%s0 + $0x68] sm:$0xff]
    %v36 = vld [vmem:[%s0 + $0x70] sm:$0xff]
    %v37 = vld [vmem:[%s0 + $0x78] sm:$0xff]
    %v38 = vld [vmem:[%s0 + $0x80] sm:$0xff]
    %v39 = vld [vmem:[%s0 + $0x88] sm:$0xff]
    %v40 = vld [vmem:[%s0 + $0x90] sm:$0xff]
    %v41 = vld [vmem:[%s0 + $0x98] sm:$0xff]
    %v42 = vld [vmem:[%s0 + $0xa0] sm:$0xff]
    %v43 = vld [vmem:[%s0 + $0xa8] sm:$0xff]
    %v44 = vld [vmem:[%s0 + $0xb0] sm:$0xff]
    %v45 = vld [vmem:[%s0 + $0xb8] sm:$0xff]
    %v46 = vld [vmem:[%s0 + $0xc0] sm:$0xff]
    %v47 = vld [vmem:[%s0 + $0xc8] sm:$0xff]
    %v48 = vld [vmem:[%s0 + $0xd0] sm:$0xff]
    %v49 = vld [vmem:[%s0 + $0xd8] sm:$0xff]
    %v50 = vld [vmem:[%s0 + $0xe0] sm:$0xff]
    %v51 = vld [vmem:[%s0 + $0xe8] sm:$0xff]
    %v52 = vld [vmem:[%s0 + $0xf0] sm:$0xff]
    %v53 = vld [vmem:[%s0 + $0xf8] sm:$0xff]
    %v54 = vld [vmem:[%s0 + $0x100] sm:$0xff]
    %v55 = vld [vmem:[%s0 + $0x108] sm:$0xff]
    %v56 = vld [vmem:[%s0 + $0x110] sm:$0xff]
    %v57 = vld [vmem:[%s0 + $0x118] sm:$0xff]
    %v58 = vld [vmem:[%s0 + $0x120] sm:$0xff]
    %v59 = vld [vmem:[%s0 + $0x128] sm:$0xff]
    %v60 = vld [vmem:[%s0 + $0x130] sm:$0xff]
    %v61 = vld [vmem:[%s0 + $0x138] sm:$0xff]
    %v62 = vld [vmem:[%s0 + $0x140] sm:$0xff]
    %v63 = vld [vmem:[%s0 + $0x148] sm:$0xff]
    %v64 = vld [vmem:[%s0 + $0x150] sm:$0xff]
    %v65 = vld [vmem:[%s0 + $0x158] sm:$0xff]
    %v66 = vld [vmem:[%s0 + $0x160] sm:$0xff]
    %v67 = vld [vmem:[%s0 + $0x168] sm:$0xff]
    %v68 = vld [vmem:[%s0 + $0x170] sm:$0xff]
    %v69 = vld [vmem:[%s0 + $0x178] sm:$0xff]
    %v70 = vld [vmem:[%s0 + $0x180] sm:$0xff]
    %v71 = vld [vmem:[%s0 + $0x188] sm:$0xff]
    %v72 = vld [vmem:[%s0 + $0x190] sm:$0xff]
    %v73 = vld [vmem:[%s0 + $0x198] sm:$0xff]
    %v74 = vld [vmem:[%s0 + $0x1a0] sm:$0xff]
    %v75 = vld [vmem:[%s0 + $0x1a8] sm:$0xff]
    %v76 = vld [vmem:[%s0 + $0x1b0] sm:$0xff]
    %v77 = vld [vmem:[%s0 + $0x1b8] sm:$0xff]
    %v78 = vld [vmem:[%s0 + $0x1c0] sm:$0xff]
    %v79 = vld [vmem:[%s0 + $0x1c8] sm:$0xff]
    %v80 = vld [vmem:[%s0 + $0x1d0] sm:$0xff]
    %v81 = vld [vmem:[%s0 + $0x1d8] sm:$0xff]
    %v82 = vld [vmem:[%s0 + $0x1e0] sm:$0xff]
    %v83 = vld [vmem:[%s0 + $0x1e8] sm:$0xff]
    %v84 = vld [vmem:[%s0 + $0x1f0] sm:$0xff]
    %v85 = vld [vmem:[%s0 + $0x1f8] sm:$0xff]
    %v86 = vld [vmem:[%s0 + $0x200] sm:$0xff]
    %v87 = vld [vmem:[%s0 + $0x208] sm:$0xff]
    %v88 = vld [vmem:[%s0 + $0x210] sm:$0xff]
    %v89 = vld [vmem:[%s0 + $0x218] sm:$0xff]
    %v90 = vld [vmem:[%s0 + $0x220] sm:$0xff]
    %v91 = vld [vmem:[%s0 + $0x228] sm:$0xff]
    %v92 = vld [vmem:[%s0 + $0x230] sm:$0xff]
    %v93 = vld [vmem:[%s0 + $0x238] sm:$0xff]
    %v94 = vld [vmem:[%s0 + $0x240] sm:$0xff]
    %v95 = vld [vmem:[%s0 + $0x248] sm:$0xff]
    %v96 = vld [vmem:[%s0 + $0x250] sm:$0xff]
    %v97 = vld [vmem:[%s0 + $0x258] sm:$0xff]
    %v98 = vld [vmem:[%s0 + $0x260] sm:$0xff]
    %v99 = vld [vmem:[%s0 + $0x268] sm:$0xff]
    %v100 = vld [vmem:[%s0 + $0x270] sm:$0xff]
    %v101 = vld [vmem:[%s0 + $0x278] sm:$0xff]
    %v102 = vld [vmem:[%s0 + $0x280] sm:$0xff]
    %v103 = vld [vmem:[%s0 + $0x288] sm:$0xff]
    %v104 = vld [vmem:[%s0 + $0x290] sm:$0xff]
    %v105 = vld [vmem:[%s0 + $0x298] sm:$0xff]
    %v106 = vld [vmem:[%s0 + $0x2a0] sm:$0xff]
    %v107 = vld [vmem:[%s0 + $0x2a8] sm:$0xff]
    %v108 = vld [vmem:[%s0 + $0x2b0] sm:$0xff]
    %v109 = vld [vmem:[%s0 + $0x2b8] sm:$0xff]
    %v110 = vld [vmem:[%s0 + $0x2c0] sm:$0xff]
    %v111 = vld [vmem:[%s0 + $0x2c8] sm:$0xff]
    %v112 = vld [vmem:[%s0 + $0x2d0] sm:$0xff]
    %v113 = vld [vmem:[%s0 + $0x2d8] sm:$0xff]
    %v114 = vld [vmem:[%s0 + $0x2e0] sm:$0xff]
    %v115 = vld [vmem:[%s0 + $0x2e8] sm:$0xff]
    %v116 = vld [vmem:[%s0 + $0x2f0] sm:$0xff]
    %v117 = vld [vmem:[%s0 + $0x2f8] sm:$0xff]
    %v118 = vld [vmem:[%s0 + $0x300] sm:$0xff]
    %v119 = vld [vmem:[%s0 + $0x308] sm:$0xff]
    %v120 = vld [vmem:[%s0 + $0x310] sm:$0xff]
    %v121 = vld [vmem:[%s0 + $0x318] sm:$0xff]
    %v122 = vld [vmem:[%s0 + $0x320] sm:$0xff]
    %v123 = vld [vmem:[%s0 + $0x328] sm:$0xff]
    %v124 = vld [vmem:[%s0 + $0x330] sm:$0xff]
    %v125 = vld [vmem:[%s0 + $0x338] sm:$0xff]
    %v126 = vld [vmem:[%s0 + $0x340] sm:$0xff]
    %v127 = vld [vmem:[%s0 + $0x348] sm:$0xff]
    %v128 = vld [vmem:[%s0 + $0x350] sm:$0xff]
    %v129 = vld [vmem:[%s0 + $0x358] sm:$0xff]
    %v130 = vld [vmem:[%s0 + $0x360] sm:$0xff]
    %v131 = vld [vmem:[%s0 + $0x368] sm:$0xff]
    %v132 = vld [vmem:[%s0 + $0x370] sm:$0xff]
    %v133 = vld [vmem:[%s0 + $0x378] sm:$0xff]
    %v134 = vpack.c.bf16 %v29, %v22
    %v135 = vpack.c.bf16 %v30, %v23
    %v136 = vpack.c.bf16 %v31, %v24
    %v137 = vpack.c.bf16 %v32, %v25
    %v138 = vpack.c.bf16 %v33, %v26
    %v139 = vpack.c.bf16 %v34, %v27
    %v140 = vpack.c.bf16 %v35, %v28
    %v141 = vpack.c.bf16 %v43, %v36
    %v142 = vpack.c.bf16 %v44, %v37
    %v143 = vpack.c.bf16 %v45, %v38
    %v144 = vpack.c.bf16 %v46, %v39
    %v145 = vpack.c.bf16 %v47, %v40
    %v146 = vpack.c.bf16 %v48, %v41
    %v147 = vpack.c.bf16 %v49, %v42
    %v148 = vpack.c.bf16 %v57, %v50
    %v149 = vpack.c.bf16 %v58, %v51
    %v150 = vpack.c.bf16 %v59, %v52
    %v151 = vpack.c.bf16 %v60, %v53
    %v152 = vpack.c.bf16 %v61, %v54
    %v153 = vpack.c.bf16 %v62, %v55
    %v154 = vpack.c.bf16 %v63, %v56
    %v155 = vpack.c.bf16 %v71, %v64
    %v156 = vpack.c.bf16 %v72, %v65
    %v157 = vpack.c.bf16 %v73, %v66
    %v158 = vpack.c.bf16 %v74, %v67
    %v159 = vpack.c.bf16 %v75, %v68
    %v160 = vpack.c.bf16 %v76, %v69
    %v161 = vpack.c.bf16 %v77, %v70
    %v162 = vpack.c.bf16 %v85, %v78
    %v163 = vpack.c.bf16 %v86, %v79
    %v164 = vpack.c.bf16 %v87, %v80
    %v165 = vpack.c.bf16 %v88, %v81
    %v166 = vpack.c.bf16 %v89, %v82
    %v167 = vpack.c.bf16 %v90, %v83
    %v168 = vpack.c.bf16 %v91, %v84
    %v169 = vpack.c.bf16 %v99, %v92
    %v170 = vpack.c.bf16 %v100, %v93
    %v171 = vpack.c.bf16 %v101, %v94
    %v172 = vpack.c.bf16 %v102, %v95
    %v173 = vpack.c.bf16 %v103, %v96
    %v174 = vpack.c.bf16 %v104, %v97
    %v175 = vpack.c.bf16 %v105, %v98
    %v176 = vpack.c.bf16 %v113, %v106
    %v177 = vpack.c.bf16 %v114, %v107
    %v178 = vpack.c.bf16 %v115, %v108
    %v179 = vpack.c.bf16 %v116, %v109
    %v180 = vpack.c.bf16 %v117, %v110
    %v181 = vpack.c.bf16 %v118, %v111
    %v182 = vpack.c.bf16 %v119, %v112
    %v183 = vpack.c.bf16 %v127, %v120
    %v184 = vpack.c.bf16 %v128, %v121
    %v185 = vpack.c.bf16 %v129, %v122
    %v186 = vpack.c.bf16 %v130, %v123
    %v187 = vpack.c.bf16 %v131, %v124
    %v188 = vpack.c.bf16 %v132, %v125
    %v189 = vpack.c.bf16 %v133, %v126
    %v190 = vld [vmem:[%s1] sm:$0xf]
    %v191 = vld [vmem:[%s1 + $0x4] sm:$0xf]
    %v192 = vld [vmem:[%s1 + $0x8] sm:$0xf]
    %v193 = vld [vmem:[%s1 + $0xc] sm:$0xf]
    %v194 = vld [vmem:[%s1 + $0x10] sm:$0xf]
    %v195 = vld [vmem:[%s1 + $0x14] sm:$0xf]
    %v196 = vld [vmem:[%s1 + $0x18] sm:$0xf]
    %v197 = vld [vmem:[%s1 + $0x1c] sm:$0xf]
    %v198 = vld [vmem:[%s1 + $0x20] sm:$0xf]
    %v199 = vld [vmem:[%s1 + $0x24] sm:$0xf]
    %v200 = vld [vmem:[%s1 + $0x28] sm:$0xf]
    %v201 = vld [vmem:[%s1 + $0x2c] sm:$0xf]
    %v202 = vld [vmem:[%s1 + $0x30] sm:$0xf]
    %v203 = vld [vmem:[%s1 + $0x34] sm:$0xf]
    %v204 = vld [vmem:[%s1 + $0x38] sm:$0xf]
    %v205 = vld [vmem:[%s1 + $0x3c] sm:$0xf]
    %v206 = vld [vmem:[%s1 + $0x40] sm:$0xf]
    %v207 = vld [vmem:[%s1 + $0x44] sm:$0xf]
    %v208 = vld [vmem:[%s1 + $0x48] sm:$0xf]
    %v209 = vld [vmem:[%s1 + $0x4c] sm:$0xf]
    %v210 = vld [vmem:[%s1 + $0x50] sm:$0xf]
    %v211 = vld [vmem:[%s1 + $0x54] sm:$0xf]
    %v212 = vld [vmem:[%s1 + $0x58] sm:$0xf]
    %v213 = vld [vmem:[%s1 + $0x5c] sm:$0xf]
    %v214 = vld [vmem:[%s1 + $0x60] sm:$0xf]
    %v215 = vld [vmem:[%s1 + $0x64] sm:$0xf]
    %v216 = vld [vmem:[%s1 + $0x68] sm:$0xf]
    %v217 = vld [vmem:[%s1 + $0x6c] sm:$0xf]
    %v218 = vld [vmem:[%s1 + $0x70] sm:$0xf]
    %v219 = vld [vmem:[%s1 + $0x74] sm:$0xf]
    %v220 = vld [vmem:[%s1 + $0x78] sm:$0xf]
    %v221 = vld [vmem:[%s1 + $0x7c] sm:$0xf]
    %v222 = vld [vmem:[%s1 + $0x80] sm:$0xf]
    %v223 = vld [vmem:[%s1 + $0x84] sm:$0xf]
    %v224 = vld [vmem:[%s1 + $0x88] sm:$0xf]
    %v225 = vld [vmem:[%s1 + $0x8c] sm:$0xf]
    %v226 = vld [vmem:[%s1 + $0x90] sm:$0xf]
    %v227 = vld [vmem:[%s1 + $0x94] sm:$0xf]
    %v228 = vld [vmem:[%s1 + $0x98] sm:$0xf]
    %v229 = vld [vmem:[%s1 + $0x9c] sm:$0xf]
    %v230 = vld [vmem:[%s1 + $0xa0] sm:$0xf]
    %v231 = vld [vmem:[%s1 + $0xa4] sm:$0xf]
    %v232 = vld [vmem:[%s1 + $0xa8] sm:$0xf]
    %v233 = vld [vmem:[%s1 + $0xac] sm:$0xf]
    %v234 = vld [vmem:[%s1 + $0xb0] sm:$0xf]
    %v235 = vld [vmem:[%s1 + $0xb4] sm:$0xf]
    %v236 = vld [vmem:[%s1 + $0xb8] sm:$0xf]
    %v237 = vld [vmem:[%s1 + $0xbc] sm:$0xf]
    %v238 = vld [vmem:[%s1 + $0xc0] sm:$0xf]
    %v239 = vld [vmem:[%s1 + $0xc4] sm:$0xf]
    %v240 = vld [vmem:[%s1 + $0xc8] sm:$0xf]
    %v241 = vld [vmem:[%s1 + $0xcc] sm:$0xf]
    %v242 = vld [vmem:[%s1 + $0xd0] sm:$0xf]
    %v243 = vld [vmem:[%s1 + $0xd4] sm:$0xf]
    %v244 = vld [vmem:[%s1 + $0xd8] sm:$0xf]
    %v245 = vld [vmem:[%s1 + $0xdc] sm:$0xf]
    %v246 = vld [vmem:[%s1 + $0xe0] sm:$0xf]
    %v247 = vld [vmem:[%s1 + $0xe4] sm:$0xf]
    %v248 = vld [vmem:[%s1 + $0xe8] sm:$0xf]
    %v249 = vld [vmem:[%s1 + $0xec] sm:$0xf]
    %v250 = vld [vmem:[%s1 + $0xf0] sm:$0xf]
    %v251 = vld [vmem:[%s1 + $0xf4] sm:$0xf]
    %v252 = vld [vmem:[%s1 + $0xf8] sm:$0xf]
    %v253 = vld [vmem:[%s1 + $0xfc] sm:$0xf]
    %v254 = vld [vmem:[%s1 + $0x100] sm:$0xf]
    %v255 = vld [vmem:[%s1 + $0x104] sm:$0xf]
    %v256 = vld [vmem:[%s1 + $0x108] sm:$0xf]
    %v257 = vld [vmem:[%s1 + $0x10c] sm:$0xf]
    %v258 = vld [vmem:[%s1 + $0x110] sm:$0xf]
    %v259 = vld [vmem:[%s1 + $0x114] sm:$0xf]
    %v260 = vld [vmem:[%s1 + $0x118] sm:$0xf]
    %v261 = vld [vmem:[%s1 + $0x11c] sm:$0xf]
    %v262 = vld [vmem:[%s1 + $0x120] sm:$0xf]
    %v263 = vld [vmem:[%s1 + $0x124] sm:$0xf]
    %v264 = vld [vmem:[%s1 + $0x128] sm:$0xf]
    %v265 = vld [vmem:[%s1 + $0x12c] sm:$0xf]
    %v266 = vld [vmem:[%s1 + $0x130] sm:$0xf]
    %v267 = vld [vmem:[%s1 + $0x134] sm:$0xf]
    %v268 = vld [vmem:[%s1 + $0x138] sm:$0xf]
    %v269 = vld [vmem:[%s1 + $0x13c] sm:$0xf]
    %v270 = vld [vmem:[%s1 + $0x140] sm:$0xf]
    %v271 = vld [vmem:[%s1 + $0x144] sm:$0xf]
    %v272 = vld [vmem:[%s1 + $0x148] sm:$0xf]
    %v273 = vld [vmem:[%s1 + $0x14c] sm:$0xf]
    %v274 = vld [vmem:[%s1 + $0x150] sm:$0xf]
    %v275 = vld [vmem:[%s1 + $0x154] sm:$0xf]
    %v276 = vld [vmem:[%s1 + $0x158] sm:$0xf]
    %v277 = vld [vmem:[%s1 + $0x15c] sm:$0xf]
    %v278 = vld [vmem:[%s1 + $0x160] sm:$0xf]
    %v279 = vld [vmem:[%s1 + $0x164] sm:$0xf]
    %v280 = vld [vmem:[%s1 + $0x168] sm:$0xf]
    %v281 = vld [vmem:[%s1 + $0x16c] sm:$0xf]
    %v282 = vld [vmem:[%s1 + $0x170] sm:$0xf]
    %v283 = vld [vmem:[%s1 + $0x174] sm:$0xf]
    %v284 = vld [vmem:[%s1 + $0x178] sm:$0xf]
    %v285 = vld [vmem:[%s1 + $0x17c] sm:$0xf]
    %v286 = vld [vmem:[%s1 + $0x180] sm:$0xf]
    %v287 = vld [vmem:[%s1 + $0x184] sm:$0xf]
    %v288 = vld [vmem:[%s2] sm:$0x1]
    %v290 = vperm.slane %v288, 0
    %v390 = vunpack.c.l.b16 %v190
    %v391 = vunpack.c.l.b16 %v191
    %v392 = vunpack.c.l.b16 %v192
    %v393 = vunpack.c.l.b16 %v193
    %v394 = vunpack.c.l.b16 %v194
    %v395 = vunpack.c.l.b16 %v195
    %v396 = vunpack.c.l.b16 %v196
    %v397 = vunpack.c.l.b16 %v197
    %v398 = vunpack.c.l.b16 %v198
    %v399 = vunpack.c.l.b16 %v199
    %v400 = vunpack.c.l.b16 %v200
    %v401 = vunpack.c.l.b16 %v201
    %v402 = vunpack.c.l.b16 %v202
    %v403 = vunpack.c.l.b16 %v203
    %v404 = vunpack.c.l.b16 %v204
    %v405 = vunpack.c.l.b16 %v205
    %v406 = vunpack.c.l.b16 %v206
    %v407 = vunpack.c.l.b16 %v207
    %v408 = vunpack.c.l.b16 %v208
    %v409 = vunpack.c.l.b16 %v209
    %v410 = vunpack.c.l.b16 %v210
    %v411 = vunpack.c.l.b16 %v211
    %v412 = vunpack.c.l.b16 %v212
    %v413 = vunpack.c.l.b16 %v213
    %v414 = vunpack.c.l.b16 %v214
    %v415 = vunpack.c.l.b16 %v215
    %v416 = vunpack.c.l.b16 %v216
    %v417 = vunpack.c.l.b16 %v217
    %v418 = vunpack.c.l.b16 %v218
    %v419 = vunpack.c.l.b16 %v219
    %v420 = vunpack.c.l.b16 %v220
    %v421 = vunpack.c.l.b16 %v221
    %v422 = vunpack.c.l.b16 %v222
    %v423 = vunpack.c.l.b16 %v223
    %v424 = vunpack.c.l.b16 %v224
    %v425 = vunpack.c.l.b16 %v225
    %v426 = vunpack.c.l.b16 %v226
    %v427 = vunpack.c.l.b16 %v227
    %v428 = vunpack.c.l.b16 %v228
    %v429 = vunpack.c.l.b16 %v229
    %v430 = vunpack.c.l.b16 %v230
    %v431 = vunpack.c.l.b16 %v231
    %v432 = vunpack.c.l.b16 %v232
    %v433 = vunpack.c.l.b16 %v233
    %v434 = vunpack.c.l.b16 %v234
    %v435 = vunpack.c.l.b16 %v235
    %v436 = vunpack.c.l.b16 %v236
    %v437 = vunpack.c.l.b16 %v237
    %v438 = vunpack.c.l.b16 %v238
    %v439 = vunpack.c.l.b16 %v239
    %v440 = vunpack.c.l.b16 %v240
    %v441 = vunpack.c.l.b16 %v241
    %v442 = vunpack.c.l.b16 %v242
    %v443 = vunpack.c.l.b16 %v243
    %v444 = vunpack.c.l.b16 %v244
    %v445 = vunpack.c.l.b16 %v245
    %v446 = vunpack.c.l.b16 %v246
    %v447 = vunpack.c.l.b16 %v247
    %v448 = vunpack.c.l.b16 %v248
    %v449 = vunpack.c.l.b16 %v249
    %v450 = vunpack.c.l.b16 %v250
    %v451 = vunpack.c.l.b16 %v251
    %v452 = vunpack.c.l.b16 %v252
    %v453 = vunpack.c.l.b16 %v253
    %v454 = vunpack.c.l.b16 %v254
    %v455 = vunpack.c.l.b16 %v255
    %v456 = vunpack.c.l.b16 %v256
    %v457 = vunpack.c.l.b16 %v257
    %v458 = vunpack.c.l.b16 %v258
    %v459 = vunpack.c.l.b16 %v259
    %v460 = vunpack.c.l.b16 %v260
    %v461 = vunpack.c.l.b16 %v261
    %v462 = vunpack.c.l.b16 %v262
    %v463 = vunpack.c.l.b16 %v263
    %v464 = vunpack.c.l.b16 %v264
    %v465 = vunpack.c.l.b16 %v265
    %v466 = vunpack.c.l.b16 %v266
    %v467 = vunpack.c.l.b16 %v267
    %v468 = vunpack.c.l.b16 %v268
    %v469 = vunpack.c.l.b16 %v269
    %v470 = vunpack.c.l.b16 %v270
    %v471 = vunpack.c.l.b16 %v271
    %v472 = vunpack.c.l.b16 %v272
    %v473 = vunpack.c.l.b16 %v273
    %v474 = vunpack.c.l.b16 %v274
    %v475 = vunpack.c.l.b16 %v275
    %v476 = vunpack.c.l.b16 %v276
    %v477 = vunpack.c.l.b16 %v277
    %v478 = vunpack.c.l.b16 %v278
    %v479 = vunpack.c.l.b16 %v279
    %v480 = vunpack.c.l.b16 %v280
    %v481 = vunpack.c.l.b16 %v281
    %v482 = vunpack.c.l.b16 %v282
    %v483 = vunpack.c.l.b16 %v283
    %v484 = vunpack.c.l.b16 %v284
    %v485 = vunpack.c.l.b16 %v285
    %v486 = vunpack.c.l.b16 %v286
    %v487 = vunpack.c.l.b16 %v287
    %v488 = vpack.c.b16 %v391, %v390
    %v489 = vpack.c.b16 %v393, %v392
    %v490 = vpack.c.b16 %v395, %v394
    %v491 = vpack.c.b16 %v397, %v396
    %v492 = vpack.c.b16 %v399, %v398
    %v493 = vpack.c.b16 %v401, %v400
    %v494 = vpack.c.b16 %v403, %v402
    %v495 = vpack.c.b16 %v405, %v404
    %v496 = vpack.c.b16 %v407, %v406
    %v497 = vpack.c.b16 %v409, %v408
    %v498 = vpack.c.b16 %v411, %v410
    %v499 = vpack.c.b16 %v413, %v412
    %v500 = vpack.c.b16 %v415, %v414
    %v501 = vpack.c.b16 %v417, %v416
    %v502 = vpack.c.b16 %v419, %v418
    %v503 = vpack.c.b16 %v421, %v420
    %v504 = vpack.c.b16 %v423, %v422
    %v505 = vpack.c.b16 %v425, %v424
    %v506 = vpack.c.b16 %v427, %v426
    %v507 = vpack.c.b16 %v429, %v428
    %v508 = vpack.c.b16 %v431, %v430
    %v509 = vpack.c.b16 %v433, %v432
    %v510 = vpack.c.b16 %v435, %v434
    %v511 = vpack.c.b16 %v437, %v436
    %v512 = vpack.c.b16 %v439, %v438
    %v513 = vpack.c.b16 %v441, %v440
    %v514 = vpack.c.b16 %v443, %v442
    %v515 = vpack.c.b16 %v445, %v444
    %v516 = vpack.c.b16 %v447, %v446
    %v517 = vpack.c.b16 %v449, %v448
    %v518 = vpack.c.b16 %v451, %v450
    %v519 = vpack.c.b16 %v453, %v452
    %v520 = vpack.c.b16 %v455, %v454
    %v521 = vpack.c.b16 %v457, %v456
    %v522 = vpack.c.b16 %v459, %v458
    %v523 = vpack.c.b16 %v461, %v460
    %v524 = vpack.c.b16 %v463, %v462
    %v525 = vpack.c.b16 %v465, %v464
    %v526 = vpack.c.b16 %v467, %v466
    %v527 = vpack.c.b16 %v469, %v468
    %v528 = vpack.c.b16 %v471, %v470
    %v529 = vpack.c.b16 %v473, %v472
    %v530 = vpack.c.b16 %v475, %v474
    %v531 = vpack.c.b16 %v477, %v476
    %v532 = vpack.c.b16 %v479, %v478
    %v533 = vpack.c.b16 %v481, %v480
    %v534 = vpack.c.b16 %v483, %v482
    %v535 = vpack.c.b16 %v485, %v484
    %v536 = vpack.c.b16 %v487, %v486
    %vm586 = vcmask 130048
    %v588 = vsel %vm586, %v140, 0
    %v591 = vsel %vm586, %v147, 0
    %v594 = vsel %vm586, %v154, 0
    %v597 = vsel %vm586, %v161, 0
    %v600 = vsel %vm586, %v168, 0
    %v603 = vsel %vm586, %v175, 0
    %v606 = vsel %vm586, %v182, 0
    %v609 = vsel %vm586, %v189, 0
    %611 = vmatpush.bf16.msra.mxu0 %v495
    %612 = vmatpush.bf16.msra.mxu0 %v494
    %613 = vmatpush.bf16.msra.mxu0 %v493
    %614 = vmatpush.bf16.msra.mxu0 %v492
    %615 = vmatpush.bf16.msra.mxu0 %v491
    %616 = vmatpush.bf16.msra.mxu0 %v490
    %617 = vmatpush.bf16.msra.mxu0 %v489
    %618 = vmatpush.bf16.msra.mxu0 %v488
    %619 = vmatmul.bf16.gmra.mxu0 %v134
    %v620 = vpop.f32.mrf.mxu0
    %v621 = vadd.f32 %v290, %v620
    %v622 = vpop.f32.mrf.mxu0
    %v623 = vadd.f32 %v290, %v622
    %624 = vmatmul.bf16.gmra.mxu0 %v141
    %v625 = vpop.f32.mrf.mxu0
    %v626 = vadd.f32 %v290, %v625
    %v627 = vpop.f32.mrf.mxu0
    %v628 = vadd.f32 %v290, %v627
    %629 = vmatmul.bf16.gmra.mxu0 %v148
    %v630 = vpop.f32.mrf.mxu0
    %v631 = vadd.f32 %v290, %v630
    %v632 = vpop.f32.mrf.mxu0
    %v633 = vadd.f32 %v290, %v632
    %634 = vmatmul.bf16.gmra.mxu0 %v155
    %v635 = vpop.f32.mrf.mxu0
    %v636 = vadd.f32 %v290, %v635
    %v637 = vpop.f32.mrf.mxu0
    %v638 = vadd.f32 %v290, %v637
    %639 = vmatmul.bf16.gmra.mxu0 %v162
    %v640 = vpop.f32.mrf.mxu0
    %v641 = vadd.f32 %v290, %v640
    %v642 = vpop.f32.mrf.mxu0
    %v643 = vadd.f32 %v290, %v642
    %644 = vmatmul.bf16.gmra.mxu0 %v169
    %v645 = vpop.f32.mrf.mxu0
    %v646 = vadd.f32 %v290, %v645
    %v647 = vpop.f32.mrf.mxu0
    %v648 = vadd.f32 %v290, %v647
    %649 = vmatmul.bf16.gmra.mxu0 %v176
    %v650 = vpop.f32.mrf.mxu0
    %v651 = vadd.f32 %v290, %v650
    %v652 = vpop.f32.mrf.mxu0
    %v653 = vadd.f32 %v290, %v652
    %654 = vmatmul.bf16.gmra.mxu0 %v183
    %v655 = vpop.f32.mrf.mxu0
    %v656 = vadd.f32 %v290, %v655
    %v657 = vpop.f32.mrf.mxu0
    %v658 = vadd.f32 %v290, %v657
    %659 = vdwg.mxu0
    %660 = vmatpush.bf16.msra.mxu0 %v503
    %661 = vmatpush.bf16.msra.mxu0 %v502
    %662 = vmatpush.bf16.msra.mxu0 %v501
    %663 = vmatpush.bf16.msra.mxu0 %v500
    %664 = vmatpush.bf16.msra.mxu0 %v499
    %665 = vmatpush.bf16.msra.mxu0 %v498
    %666 = vmatpush.bf16.msra.mxu0 %v497
    %667 = vmatpush.bf16.msra.mxu0 %v496
    %668 = vmatmul.bf16.gmra.mxu0 %v135
    %v669 = vpop.f32.mrf.mxu0
    %v670 = vadd.f32 %v621, %v669
    %v671 = vpop.f32.mrf.mxu0
    %v672 = vadd.f32 %v623, %v671
    %673 = vmatmul.bf16.gmra.mxu0 %v142
    %v674 = vpop.f32.mrf.mxu0
    %v675 = vadd.f32 %v626, %v674
    %v676 = vpop.f32.mrf.mxu0
    %v677 = vadd.f32 %v628, %v676
    %678 = vmatmul.bf16.gmra.mxu0 %v149
    %v679 = vpop.f32.mrf.mxu0
    %v680 = vadd.f32 %v631, %v679
    %v681 = vpop.f32.mrf.mxu0
    %v682 = vadd.f32 %v633, %v681
    %683 = vmatmul.bf16.gmra.mxu0 %v156
    %v684 = vpop.f32.mrf.mxu0
    %v685 = vadd.f32 %v636, %v684
    %v686 = vpop.f32.mrf.mxu0
    %v687 = vadd.f32 %v638, %v686
    %688 = vmatmul.bf16.gmra.mxu0 %v163
    %v689 = vpop.f32.mrf.mxu0
    %v690 = vadd.f32 %v641, %v689
    %v691 = vpop.f32.mrf.mxu0
    %v692 = vadd.f32 %v643, %v691
    %693 = vmatmul.bf16.gmra.mxu0 %v170
    %v694 = vpop.f32.mrf.mxu0
    %v695 = vadd.f32 %v646, %v694
    %v696 = vpop.f32.mrf.mxu0
    %v697 = vadd.f32 %v648, %v696
    %698 = vmatmul.bf16.gmra.mxu0 %v177
    %v699 = vpop.f32.mrf.mxu0
    %v700 = vadd.f32 %v651, %v699
    %v701 = vpop.f32.mrf.mxu0
    %v702 = vadd.f32 %v653, %v701
    %703 = vmatmul.bf16.gmra.mxu0 %v184
    %v704 = vpop.f32.mrf.mxu0
    %v705 = vadd.f32 %v656, %v704
    %v706 = vpop.f32.mrf.mxu0
    %v707 = vadd.f32 %v658, %v706
    %708 = vdwg.mxu0
    %709 = vmatpush.bf16.msra.mxu0 %v511
    %710 = vmatpush.bf16.msra.mxu0 %v510
    %711 = vmatpush.bf16.msra.mxu0 %v509
    %712 = vmatpush.bf16.msra.mxu0 %v508
    %713 = vmatpush.bf16.msra.mxu0 %v507
    %714 = vmatpush.bf16.msra.mxu0 %v506
    %715 = vmatpush.bf16.msra.mxu0 %v505
    %716 = vmatpush.bf16.msra.mxu0 %v504
    %717 = vmatmul.bf16.gmra.mxu0 %v136
    %v718 = vpop.f32.mrf.mxu0
    %v719 = vadd.f32 %v670, %v718
    %v720 = vpop.f32.mrf.mxu0
    %v721 = vadd.f32 %v672, %v720
    %722 = vmatmul.bf16.gmra.mxu0 %v143
    %v723 = vpop.f32.mrf.mxu0
    %v724 = vadd.f32 %v675, %v723
    %v725 = vpop.f32.mrf.mxu0
    %v726 = vadd.f32 %v677, %v725
    %727 = vmatmul.bf16.gmra.mxu0 %v150
    %v728 = vpop.f32.mrf.mxu0
    %v729 = vadd.f32 %v680, %v728
    %v730 = vpop.f32.mrf.mxu0
    %v731 = vadd.f32 %v682, %v730
    %732 = vmatmul.bf16.gmra.mxu0 %v157
    %v733 = vpop.f32.mrf.mxu0
    %v734 = vadd.f32 %v685, %v733
    %v735 = vpop.f32.mrf.mxu0
    %v736 = vadd.f32 %v687, %v735
    %737 = vmatmul.bf16.gmra.mxu0 %v164
    %v738 = vpop.f32.mrf.mxu0
    %v739 = vadd.f32 %v690, %v738
    %v740 = vpop.f32.mrf.mxu0
    %v741 = vadd.f32 %v692, %v740
    %742 = vmatmul.bf16.gmra.mxu0 %v171
    %v743 = vpop.f32.mrf.mxu0
    %v744 = vadd.f32 %v695, %v743
    %v745 = vpop.f32.mrf.mxu0
    %v746 = vadd.f32 %v697, %v745
    %747 = vmatmul.bf16.gmra.mxu0 %v178
    %v748 = vpop.f32.mrf.mxu0
    %v749 = vadd.f32 %v700, %v748
    %v750 = vpop.f32.mrf.mxu0
    %v751 = vadd.f32 %v702, %v750
    %752 = vmatmul.bf16.gmra.mxu0 %v185
    %v753 = vpop.f32.mrf.mxu0
    %v754 = vadd.f32 %v705, %v753
    %v755 = vpop.f32.mrf.mxu0
    %v756 = vadd.f32 %v707, %v755
    %757 = vdwg.mxu0
    %758 = vmatpush.bf16.msra.mxu0 %v519
    %759 = vmatpush.bf16.msra.mxu0 %v518
    %760 = vmatpush.bf16.msra.mxu0 %v517
    %761 = vmatpush.bf16.msra.mxu0 %v516
    %762 = vmatpush.bf16.msra.mxu0 %v515
    %763 = vmatpush.bf16.msra.mxu0 %v514
    %764 = vmatpush.bf16.msra.mxu0 %v513
    %765 = vmatpush.bf16.msra.mxu0 %v512
    %766 = vmatmul.bf16.gmra.mxu0 %v137
    %v767 = vpop.f32.mrf.mxu0
    %v768 = vadd.f32 %v719, %v767
    %v769 = vpop.f32.mrf.mxu0
    %v770 = vadd.f32 %v721, %v769
    %771 = vmatmul.bf16.gmra.mxu0 %v144
    %v772 = vpop.f32.mrf.mxu0
    %v773 = vadd.f32 %v724, %v772
    %v774 = vpop.f32.mrf.mxu0
    %v775 = vadd.f32 %v726, %v774
    %776 = vmatmul.bf16.gmra.mxu0 %v151
    %v777 = vpop.f32.mrf.mxu0
    %v778 = vadd.f32 %v729, %v777
    %v779 = vpop.f32.mrf.mxu0
    %v780 = vadd.f32 %v731, %v779
    %781 = vmatmul.bf16.gmra.mxu0 %v158
    %v782 = vpop.f32.mrf.mxu0
    %v783 = vadd.f32 %v734, %v782
    %v784 = vpop.f32.mrf.mxu0
    %v785 = vadd.f32 %v736, %v784
    %786 = vmatmul.bf16.gmra.mxu0 %v165
    %v787 = vpop.f32.mrf.mxu0
    %v788 = vadd.f32 %v739, %v787
    %v789 = vpop.f32.mrf.mxu0
    %v790 = vadd.f32 %v741, %v789
    %791 = vmatmul.bf16.gmra.mxu0 %v172
    %v792 = vpop.f32.mrf.mxu0
    %v793 = vadd.f32 %v744, %v792
    %v794 = vpop.f32.mrf.mxu0
    %v795 = vadd.f32 %v746, %v794
    %796 = vmatmul.bf16.gmra.mxu0 %v179
    %v797 = vpop.f32.mrf.mxu0
    %v798 = vadd.f32 %v749, %v797
    %v799 = vpop.f32.mrf.mxu0
    %v800 = vadd.f32 %v751, %v799
    %801 = vmatmul.bf16.gmra.mxu0 %v186
    %v802 = vpop.f32.mrf.mxu0
    %v803 = vadd.f32 %v754, %v802
    %v804 = vpop.f32.mrf.mxu0
    %v805 = vadd.f32 %v756, %v804
    %806 = vdwg.mxu0
    %807 = vmatpush.bf16.msra.mxu0 %v527
    %808 = vmatpush.bf16.msra.mxu0 %v526
    %809 = vmatpush.bf16.msra.mxu0 %v525
    %810 = vmatpush.bf16.msra.mxu0 %v524
    %811 = vmatpush.bf16.msra.mxu0 %v523
    %812 = vmatpush.bf16.msra.mxu0 %v522
    %813 = vmatpush.bf16.msra.mxu0 %v521
    %814 = vmatpush.bf16.msra.mxu0 %v520
    %815 = vmatmul.bf16.gmra.mxu0 %v138
    %v816 = vpop.f32.mrf.mxu0
    %v817 = vadd.f32 %v768, %v816
    %v818 = vpop.f32.mrf.mxu0
    %v819 = vadd.f32 %v770, %v818
    %820 = vmatmul.bf16.gmra.mxu0 %v145
    %v821 = vpop.f32.mrf.mxu0
    %v822 = vadd.f32 %v773, %v821
    %v823 = vpop.f32.mrf.mxu0
    %v824 = vadd.f32 %v775, %v823
    %825 = vmatmul.bf16.gmra.mxu0 %v152
    %v826 = vpop.f32.mrf.mxu0
    %v827 = vadd.f32 %v778, %v826
    %v828 = vpop.f32.mrf.mxu0
    %v829 = vadd.f32 %v780, %v828
    %830 = vmatmul.bf16.gmra.mxu0 %v159
    %v831 = vpop.f32.mrf.mxu0
    %v832 = vadd.f32 %v783, %v831
    %v833 = vpop.f32.mrf.mxu0
    %v834 = vadd.f32 %v785, %v833
    %835 = vmatmul.bf16.gmra.mxu0 %v166
    %v836 = vpop.f32.mrf.mxu0
    %v837 = vadd.f32 %v788, %v836
    %v838 = vpop.f32.mrf.mxu0
    %v839 = vadd.f32 %v790, %v838
    %840 = vmatmul.bf16.gmra.mxu0 %v173
    %v841 = vpop.f32.mrf.mxu0
    %v842 = vadd.f32 %v793, %v841
    %v843 = vpop.f32.mrf.mxu0
    %v844 = vadd.f32 %v795, %v843
    %845 = vmatmul.bf16.gmra.mxu0 %v180
    %v846 = vpop.f32.mrf.mxu0
    %v847 = vadd.f32 %v798, %v846
    %v848 = vpop.f32.mrf.mxu0
    %v849 = vadd.f32 %v800, %v848
    %850 = vmatmul.bf16.gmra.mxu0 %v187
    %v851 = vpop.f32.mrf.mxu0
    %v852 = vadd.f32 %v803, %v851
    %v853 = vpop.f32.mrf.mxu0
    %v854 = vadd.f32 %v805, %v853
    %855 = vdwg.mxu0
    %856 = vmatpush.bf16.msra.mxu0 %v535
    %857 = vmatpush.bf16.msra.mxu0 %v534
    %858 = vmatpush.bf16.msra.mxu0 %v533
    %859 = vmatpush.bf16.msra.mxu0 %v532
    %860 = vmatpush.bf16.msra.mxu0 %v531
    %861 = vmatpush.bf16.msra.mxu0 %v530
    %862 = vmatpush.bf16.msra.mxu0 %v529
    %863 = vmatpush.bf16.msra.mxu0 %v528
    %864 = vmatmul.bf16.gmra.mxu0 %v139
    %v865 = vpop.f32.mrf.mxu0
    %v866 = vadd.f32 %v817, %v865
    %v867 = vpop.f32.mrf.mxu0
    %v868 = vadd.f32 %v819, %v867
    %869 = vmatmul.bf16.gmra.mxu0 %v146
    %v870 = vpop.f32.mrf.mxu0
    %v871 = vadd.f32 %v822, %v870
    %v872 = vpop.f32.mrf.mxu0
    %v873 = vadd.f32 %v824, %v872
    %874 = vmatmul.bf16.gmra.mxu0 %v153
    %v875 = vpop.f32.mrf.mxu0
    %v876 = vadd.f32 %v827, %v875
    %v877 = vpop.f32.mrf.mxu0
    %v878 = vadd.f32 %v829, %v877
    %879 = vmatmul.bf16.gmra.mxu0 %v160
    %v880 = vpop.f32.mrf.mxu0
    %v881 = vadd.f32 %v832, %v880
    %v882 = vpop.f32.mrf.mxu0
    %v883 = vadd.f32 %v834, %v882
    %884 = vmatmul.bf16.gmra.mxu0 %v167
    %v885 = vpop.f32.mrf.mxu0
    %v886 = vadd.f32 %v837, %v885
    %v887 = vpop.f32.mrf.mxu0
    %v888 = vadd.f32 %v839, %v887
    %889 = vmatmul.bf16.gmra.mxu0 %v174
    %v890 = vpop.f32.mrf.mxu0
    %v891 = vadd.f32 %v842, %v890
    %v892 = vpop.f32.mrf.mxu0
    %v893 = vadd.f32 %v844, %v892
    %894 = vmatmul.bf16.gmra.mxu0 %v181
    %v895 = vpop.f32.mrf.mxu0
    %v896 = vadd.f32 %v847, %v895
    %v897 = vpop.f32.mrf.mxu0
    %v898 = vadd.f32 %v849, %v897
    %899 = vmatmul.bf16.gmra.mxu0 %v188
    %v900 = vpop.f32.mrf.mxu0
    %v901 = vadd.f32 %v852, %v900
    %v902 = vpop.f32.mrf.mxu0
    %v903 = vadd.f32 %v854, %v902
    %904 = vdwg.mxu0
    %905 = vmatpush.bf16.msra.mxu0 0
    %906 = vmatpush.bf16.msra.mxu0 0
    %907 = vmatpush.bf16.msra.mxu0 0
    %908 = vmatpush.bf16.msra.mxu0 0
    %909 = vmatpush.bf16.msra.mxu0 0
    %910 = vmatpush.bf16.msra.mxu0 0
    %911 = vmatpush.bf16.msra.mxu0 0
    %912 = vmatpush.bf16.msra.mxu0 %v536
    %913 = vmatmul.bf16.gmra.mxu0 %v588
    %v914 = vpop.f32.mrf.mxu0
    %v915 = vadd.f32 %v866, %v914
    %v916 = vpop.f32.mrf.mxu0
    %v917 = vadd.f32 %v868, %v916
    %918 = vmatmul.bf16.gmra.mxu0 %v591
    %v919 = vpop.f32.mrf.mxu0
    %v920 = vadd.f32 %v871, %v919
    %v921 = vpop.f32.mrf.mxu0
    %v922 = vadd.f32 %v873, %v921
    %923 = vmatmul.bf16.gmra.mxu0 %v594
    %v924 = vpop.f32.mrf.mxu0
    %v925 = vadd.f32 %v876, %v924
    %v926 = vpop.f32.mrf.mxu0
    %v927 = vadd.f32 %v878, %v926
    %928 = vmatmul.bf16.gmra.mxu0 %v597
    %v929 = vpop.f32.mrf.mxu0
    %v930 = vadd.f32 %v881, %v929
    %v931 = vpop.f32.mrf.mxu0
    %v932 = vadd.f32 %v883, %v931
    %933 = vmatmul.bf16.gmra.mxu0 %v600
    %v934 = vpop.f32.mrf.mxu0
    %v935 = vadd.f32 %v886, %v934
    %v936 = vpop.f32.mrf.mxu0
    %v937 = vadd.f32 %v888, %v936
    %938 = vmatmul.bf16.gmra.mxu0 %v603
    %v939 = vpop.f32.mrf.mxu0
    %v940 = vadd.f32 %v891, %v939
    %v941 = vpop.f32.mrf.mxu0
    %v942 = vadd.f32 %v893, %v941
    %943 = vmatmul.bf16.gmra.mxu0 %v606
    %v944 = vpop.f32.mrf.mxu0
    %v945 = vadd.f32 %v896, %v944
    %v946 = vpop.f32.mrf.mxu0
    %v947 = vadd.f32 %v898, %v946
    %948 = vmatmul.bf16.gmra.mxu0 %v609
    %v949 = vpop.f32.mrf.mxu0
    %v950 = vadd.f32 %v901, %v949
    %v951 = vpop.f32.mrf.mxu0
    %v952 = vadd.f32 %v903, %v951
    %953 = vdwg.mxu0
    %v954 = vmax.f32 %v915, 0.0
    %v955 = vmax.f32 %v917, 0.0
    %v956 = vmax.f32 %v920, 0.0
    %v957 = vmax.f32 %v922, 0.0
    %v958 = vmax.f32 %v925, 0.0
    %v959 = vmax.f32 %v927, 0.0
    %v960 = vmax.f32 %v930, 0.0
    %v961 = vmax.f32 %v932, 0.0
    %v962 = vmax.f32 %v935, 0.0
    %v963 = vmax.f32 %v937, 0.0
    %v964 = vmax.f32 %v940, 0.0
    %v965 = vmax.f32 %v942, 0.0
    %v966 = vmax.f32 %v945, 0.0
    %v967 = vmax.f32 %v947, 0.0
    %v968 = vmax.f32 %v950, 0.0
    %v969 = vmax.f32 %v952, 0.0
    %v970 = vpack.c.bf16 %v955, %v954
    %v971 = vpack.c.bf16 %v957, %v956
    %v972 = vpack.c.bf16 %v959, %v958
    %v973 = vpack.c.bf16 %v961, %v960
    %v974 = vpack.c.bf16 %v963, %v962
    %v975 = vpack.c.bf16 %v965, %v964
    %v976 = vpack.c.bf16 %v967, %v966
    %v977 = vpack.c.bf16 %v969, %v968
    %v978 = vld [vmem:[%s3] sm:$0xf]
    %v979 = vld [vmem:[%s3 + $0x4] sm:$0xf]
    %v980 = vld [vmem:[%s3 + $0x8] sm:$0xf]
    %v981 = vld [vmem:[%s3 + $0xc] sm:$0xf]
    %v982 = vld [vmem:[%s3 + $0x10] sm:$0xf]
    %v983 = vld [vmem:[%s3 + $0x14] sm:$0xf]
    %v984 = vld [vmem:[%s3 + $0x18] sm:$0xf]
    %v985 = vld [vmem:[%s3 + $0x1c] sm:$0xf]
    %v986 = vld [vmem:[%s3 + $0x20] sm:$0xf]
    %v987 = vld [vmem:[%s3 + $0x24] sm:$0xf]
    %v988 = vld [vmem:[%s3 + $0x28] sm:$0xf]
    %v989 = vld [vmem:[%s3 + $0x2c] sm:$0xf]
    %v990 = vld [vmem:[%s3 + $0x30] sm:$0xf]
    %v991 = vld [vmem:[%s3 + $0x34] sm:$0xf]
    %v992 = vld [vmem:[%s3 + $0x38] sm:$0xf]
    %v993 = vld [vmem:[%s3 + $0x3c] sm:$0xf]
    %v994 = vld [vmem:[%s4] sm:$0x1]
    %v996 = vperm.slane %v994, 0
    %v1014 = vunpack.c.l.b16 %v978
    %v1015 = vunpack.c.l.b16 %v979
    %v1016 = vunpack.c.l.b16 %v980
    %v1017 = vunpack.c.l.b16 %v981
    %v1018 = vunpack.c.l.b16 %v982
    %v1019 = vunpack.c.l.b16 %v983
    %v1020 = vunpack.c.l.b16 %v984
    %v1021 = vunpack.c.l.b16 %v985
    %v1022 = vunpack.c.l.b16 %v986
    %v1023 = vunpack.c.l.b16 %v987
    %v1024 = vunpack.c.l.b16 %v988
    %v1025 = vunpack.c.l.b16 %v989
    %v1026 = vunpack.c.l.b16 %v990
    %v1027 = vunpack.c.l.b16 %v991
    %v1028 = vunpack.c.l.b16 %v992
    %v1029 = vunpack.c.l.b16 %v993
    %v1030 = vpack.c.b16 %v1015, %v1014
    %v1031 = vpack.c.b16 %v1017, %v1016
    %v1032 = vpack.c.b16 %v1019, %v1018
    %v1033 = vpack.c.b16 %v1021, %v1020
    %v1034 = vpack.c.b16 %v1023, %v1022
    %v1035 = vpack.c.b16 %v1025, %v1024
    %v1036 = vpack.c.b16 %v1027, %v1026
    %v1037 = vpack.c.b16 %v1029, %v1028
    %1046 = vmatpush.bf16.msra.mxu0 %v1037
    %1047 = vmatpush.bf16.msra.mxu0 %v1036
    %1048 = vmatpush.bf16.msra.mxu0 %v1035
    %1049 = vmatpush.bf16.msra.mxu0 %v1034
    %1050 = vmatpush.bf16.msra.mxu0 %v1033
    %1051 = vmatpush.bf16.msra.mxu0 %v1032
    %1052 = vmatpush.bf16.msra.mxu0 %v1031
    %1053 = vmatpush.bf16.msra.mxu0 %v1030
    %1054 = vmatmul.bf16.gmra.mxu0 %v970
    %v1055 = vpop.f32.mrf.mxu0
    %v1056 = vadd.f32 %v996, %v1055
    %v1057 = vpop.f32.mrf.mxu0
    %v1058 = vadd.f32 %v996, %v1057
    %1059 = vmatmul.bf16.gmra.mxu0 %v971
    %v1060 = vpop.f32.mrf.mxu0
    %v1061 = vadd.f32 %v996, %v1060
    %v1062 = vpop.f32.mrf.mxu0
    %v1063 = vadd.f32 %v996, %v1062
    %1064 = vmatmul.bf16.gmra.mxu0 %v972
    %v1065 = vpop.f32.mrf.mxu0
    %v1066 = vadd.f32 %v996, %v1065
    %v1067 = vpop.f32.mrf.mxu0
    %v1068 = vadd.f32 %v996, %v1067
    %1069 = vmatmul.bf16.gmra.mxu0 %v973
    %v1070 = vpop.f32.mrf.mxu0
    %v1071 = vadd.f32 %v996, %v1070
    %v1072 = vpop.f32.mrf.mxu0
    %v1073 = vadd.f32 %v996, %v1072
    %1074 = vmatmul.bf16.gmra.mxu0 %v974
    %v1075 = vpop.f32.mrf.mxu0
    %v1076 = vadd.f32 %v996, %v1075
    %v1077 = vpop.f32.mrf.mxu0
    %v1078 = vadd.f32 %v996, %v1077
    %1079 = vmatmul.bf16.gmra.mxu0 %v975
    %v1080 = vpop.f32.mrf.mxu0
    %v1081 = vadd.f32 %v996, %v1080
    %v1082 = vpop.f32.mrf.mxu0
    %v1083 = vadd.f32 %v996, %v1082
    %1084 = vmatmul.bf16.gmra.mxu0 %v976
    %v1085 = vpop.f32.mrf.mxu0
    %v1086 = vadd.f32 %v996, %v1085
    %v1087 = vpop.f32.mrf.mxu0
    %v1088 = vadd.f32 %v996, %v1087
    %1089 = vmatmul.bf16.gmra.mxu0 %v977
    %v1090 = vpop.f32.mrf.mxu0
    %v1091 = vadd.f32 %v996, %v1090
    %v1092 = vpop.f32.mrf.mxu0
    %v1093 = vadd.f32 %v996, %v1092
    %1094 = vdwg.mxu0
    %v1095 = vpack.c.bf16 %v1056, %v1056
    %v1096 = vpack.c.bf16 %v1058, %v1058
    %v1097 = vpack.c.bf16 %v1061, %v1061
    %v1098 = vpack.c.bf16 %v1063, %v1063
    %v1099 = vpack.c.bf16 %v1066, %v1066
    %v1100 = vpack.c.bf16 %v1068, %v1068
    %v1101 = vpack.c.bf16 %v1071, %v1071
    %v1102 = vpack.c.bf16 %v1073, %v1073
    %v1103 = vpack.c.bf16 %v1076, %v1076
    %v1104 = vpack.c.bf16 %v1078, %v1078
    %v1105 = vpack.c.bf16 %v1081, %v1081
    %v1106 = vpack.c.bf16 %v1083, %v1083
    %v1107 = vpack.c.bf16 %v1086, %v1086
    %v1108 = vpack.c.bf16 %v1088, %v1088
    %v1109 = vpack.c.bf16 %v1091, %v1091
    %v1110 = vpack.c.bf16 %v1093, %v1093
    %1111 = vst [vmem:[#allocation2] sm:$0xf] %v1095
    %1112 = vst [vmem:[#allocation2 + $0x4] sm:$0xf] %v1096
    %1113 = vst [vmem:[#allocation2 + $0x8] sm:$0xf] %v1097
    %1114 = vst [vmem:[#allocation2 + $0xc] sm:$0xf] %v1098
    %1115 = vst [vmem:[#allocation2 + $0x10] sm:$0xf] %v1099
    %1116 = vst [vmem:[#allocation2 + $0x14] sm:$0xf] %v1100
    %1117 = vst [vmem:[#allocation2 + $0x18] sm:$0xf] %v1101
    %1118 = vst [vmem:[#allocation2 + $0x1c] sm:$0xf] %v1102
    %1119 = vst [vmem:[#allocation2 + $0x20] sm:$0xf] %v1103
    %1120 = vst [vmem:[#allocation2 + $0x24] sm:$0xf] %v1104
    %1121 = vst [vmem:[#allocation2 + $0x28] sm:$0xf] %v1105
    %1122 = vst [vmem:[#allocation2 + $0x2c] sm:$0xf] %v1106
    %1123 = vst [vmem:[#allocation2 + $0x30] sm:$0xf] %v1107
    %1124 = vst [vmem:[#allocation2 + $0x34] sm:$0xf] %v1108
    %1125 = vst [vmem:[#allocation2 + $0x38] sm:$0xf] %v1109
    %1126 = vst [vmem:[#allocation2 + $0x3c] sm:$0xf] %v1110
    // Predicated region
    $region22: #{tpu_custom_call.1} parent=1 // pred_check
      _
    $region23: #{tpu_custom_call.1} parent=1 // pred_check_branch
      %1128 = sbr.rel (0) target = $region25
    $region24: #{tpu_custom_call.1} parent=1 // pred_region
      %1130 = vsyncadd [#allocation3], 0
      %s1131 = sshll.u32 [#allocation2], 4
      %s1132 = int_to_ptr.vmem [resolvable:$true] %s1131
      %s1133 = sshll.u32 %s5, 4
      %s1134 = int_to_ptr.hbm [resolvable:$true] %s1133
      %1139 = dma.vmem_to_hbm [thread:$0]  %s1132, 1024, %s1134, [#allocation3], 64, 64, 4
    $region25: #{tpu_custom_call.1} parent=1 // pred_fallthru
      _
    // Predicated region
    $region26: #{tpu_custom_call.1} parent=1 // pred_check
      _
    $region27: #{tpu_custom_call.1} parent=1 // pred_check_branch
      %1141 = sbr.rel (0) target = $region29
    $region28: #{tpu_custom_call.1} parent=1 // pred_region
      %1143 = dma.done [#allocation3], 1024
    $region29: #{tpu_custom_call.1} parent=1 // pred_fallthru
      _
    %1144 = vsyncpa [#allocation3], 1

</llo_original>
